<compile_context>
chip_gen: v7x
topology: tpu7x:2x2x1
jax: 0.10.0
libtpu: 0.0.40
codegen_flags: <defaults>
</compile_context>

<pallas_src>
import jax
import jax.numpy as jnp
from jax.experimental import pallas as pl
from jax.experimental.pallas import tpu as pltpu


def _round_up(x: int, m: int) -> int:
    return (x + m - 1) // m * m


def _pick_row_tile(B: int, block_rows: int):
    """Pick a row tile TB (multiple of 8) and padded batch Bp.

    Prefers a TB that divides B exactly (so no jnp.pad copy of x is needed)
    and, for B > 8, keeps at least two grid steps so v7x's two TensorCores can
    both get work from the "parallel" batch axis.
    """
    cap = min(block_rows, _round_up(B, 8))
    if B > 8:
        cap = min(cap, max(8, _round_up((B + 1) // 2, 8)))
    tb = cap
    while tb >= 8:
        if B % tb == 0:
            return tb, B            # divides exactly -> no padding copy
        tb -= 8
    return cap, _round_up(B, cap)   # fallback: pad the tail block


def _decoder_kernel(x_ref, w1_ref, b1_ref, w2_ref, b2_ref, w3_ref, b3_ref,
                    o_ref):
    # x tile: [TB, I] f32 in HBM/VMEM; cast to bf16 only for the MXU operands
    # (f32 accumulation via preferred_element_type).
    x = x_ref[...].astype(jnp.bfloat16)

    h1 = jnp.dot(x, w1_ref[...], preferred_element_type=jnp.float32)
    h1 = jnp.maximum(h1 + b1_ref[...], 0.0)                       # fc1 + ReLU (f32)

    h2 = jnp.dot(h1.astype(jnp.bfloat16), w2_ref[...],
                 preferred_element_type=jnp.float32)
    h2 = jnp.maximum(h2 + b2_ref[...], 0.0)                       # fc2 + ReLU (f32)

    # fc3 has N=1: do it as a VPU multiply + lane reduction (XLU) instead of an
    # MXU matmul that would use 1/256 of the result path.  w3_ref is [1, H2].
    logit = jnp.sum(h2 * w3_ref[...], axis=-1, keepdims=True) + b3_ref[...]

    # sigmoid(x) = 0.5 * (1 + tanh(x/2)): one EUP op per vreg (no exp + divide).
    prob = 0.5 + 0.5 * jnp.tanh(0.5 * logit)
    o_ref[...] = prob.astype(o_ref.dtype)


def decoder_net_forward(x, params, *, block_rows=2048):
    """Pallas equivalent of DecoderNet.forward.

    x:      float32 [B, 2*Zs]
    params: (W1 [I,H1], b1 [H1], W2 [H1,H2], b2 [H2], W3 [H2,1], b3 [1])
            (weights stored input-major, i.e. already transposed vs torch's
             nn.Linear.weight, so forward is x @ W + b)
    returns float32 [B, 1]
    """
    w1, b1, w2, b2, w3, b3 = params
    B, I = x.shape
    H1 = w1.shape[1]
    H2 = w2.shape[1]
    O = w3.shape[1]
    assert O == 1, "DecoderNet has a single output unit"

    TB, Bp = _pick_row_tile(B, block_rows)
    if Bp != B:
        x = jnp.pad(x, ((0, Bp - B), (0, 0)))

    # MXU operands in bf16 (cast once; tiny arrays), everything else f32.
    w1_bf = w1.astype(jnp.bfloat16)
    w2_bf = w2.astype(jnp.bfloat16)
    b1_2d = b1.reshape(1, H1).astype(jnp.float32)
    b2_2d = b2.reshape(1, H2).astype(jnp.float32)
    w3_row = w3.reshape(1, H2).astype(jnp.float32)   # used on the VPU, keep f32
    b3_2d = b3.reshape(1, 1).astype(jnp.float32)

    grid = (Bp // TB,)
    out = pl.pallas_call(
        _decoder_kernel,
        out_shape=jax.ShapeDtypeStruct((Bp, O), jnp.float32),
        grid_spec=pltpu.PrefetchScalarGridSpec(
            num_scalar_prefetch=0,
            grid=grid,
            in_specs=[
                # x streams through HBM, one TB-row slab per step.
                pl.BlockSpec((TB, I), lambda i: (i, 0)),
                # Weights / biases: full arrays, constant block index
                # -> DMA'd into VMEM once and reused for every grid step.
                pl.BlockSpec((I, H1), lambda i: (0, 0)),
                pl.BlockSpec((1, H1), lambda i: (0, 0)),
                pl.BlockSpec((H1, H2), lambda i: (0, 0)),
                pl.BlockSpec((1, H2), lambda i: (0, 0)),
                pl.BlockSpec((1, H2), lambda i: (0, 0)),
                pl.BlockSpec((1, 1), lambda i: (0, 0)),
            ],
            out_specs=pl.BlockSpec((TB, O), lambda i: (i, 0)),
        ),
        compiler_params=pltpu.CompilerParams(
            dimension_semantics=("parallel",),
        ),
    )(x, w1_bf, b1_2d, w2_bf, b2_2d, w3_row, b3_2d)

    return out if Bp == B else out[:B]


def _ref_forward(x, params):
    w1, b1, w2, b2, w3, b3 = params
    h1 = jnp.maximum(x @ w1 + b1, 0.0)
    h2 = jnp.maximum(h1 @ w2 + b2, 0.0)
    return 1.0 / (1.0 + jnp.exp(-(h2 @ w3 + b3)))


if __name__ == "__main__":
    key = jax.random.PRNGKey(0)
    ks = jax.random.split(key, 8)

    # Small shapes consistent with the module: Zs = 32 -> I=H1=64, H2=32, O=1.
    Zs = 32
    I, H1, H2, O = 2 * Zs, 2 * Zs, Zs, 1
    B = 16

    scale = 0.1
    w1 = scale * jax.random.normal(ks[0], (I, H1), dtype=jnp.float32)
    b1 = scale * jax.random.normal(ks[1], (H1,), dtype=jnp.float32)
    w2 = scale * jax.random.normal(ks[2], (H1, H2), dtype=jnp.float32)
    b2 = scale * jax.random.normal(ks[3], (H2,), dtype=jnp.float32)
    w3 = scale * jax.random.normal(ks[4], (H2, O), dtype=jnp.float32)
    b3 = scale * jax.random.normal(ks[5], (O,), dtype=jnp.float32)
    params = (w1, b1, w2, b2, w3, b3)

    x = jax.random.normal(ks[6], (B, I), dtype=jnp.float32)

    prob = jax.block_until_ready(decoder_net_forward(x, params))
    ref = _ref_forward(x, params)

    assert prob.shape == (B, O), prob.shape
    # bf16 MXU operands (f32 accumulation) -> slightly looser tolerance vs the
    # pure-f32 reference.
    assert jnp.allclose(prob, ref, atol=2e-2, rtol=2e-2), "mismatch vs reference"

    print("KERNEL_OK")
</pallas_src>

<mosaic_0001>
module attributes {stable_mosaic.version = 11 : i64} {
  func.func @_decoder_kernel(%arg0: i32, %arg1: memref<8x64xf32, #tpu.memory_space<vmem>>, %arg2: memref<64x64xbf16, #tpu.memory_space<vmem>>, %arg3: memref<1x64xf32, #tpu.memory_space<vmem>>, %arg4: memref<64x32xbf16, #tpu.memory_space<vmem>>, %arg5: memref<1x32xf32, #tpu.memory_space<vmem>>, %arg6: memref<1x32xf32, #tpu.memory_space<vmem>>, %arg7: memref<1x1xf32, #tpu.memory_space<vmem>>, %arg8: memref<8x1xf32, #tpu.memory_space<vmem>>) attributes {dimension_semantics = [#tpu.dimension_semantics<parallel>], iteration_bounds = array<i64: 2>, scalar_prefetch = 0 : i64, scratch_operands = 0 : i64, tpu.core_type = #tpu.core_type<tc>, window_params = [{transform_indices = @transform_0, window_bounds = array<i64: 8, 64>}, {pipeline_mode = #tpu.pipeline_mode<synchronous>, transform_indices = @transform_1, window_bounds = array<i64: 64, 64>}, {pipeline_mode = #tpu.pipeline_mode<synchronous>, transform_indices = @transform_2, window_bounds = array<i64: 1, 64>}, {pipeline_mode = #tpu.pipeline_mode<synchronous>, transform_indices = @transform_3, window_bounds = array<i64: 64, 32>}, {pipeline_mode = #tpu.pipeline_mode<synchronous>, transform_indices = @transform_4, window_bounds = array<i64: 1, 32>}, {pipeline_mode = #tpu.pipeline_mode<synchronous>, transform_indices = @transform_5, window_bounds = array<i64: 1, 32>}, {pipeline_mode = #tpu.pipeline_mode<synchronous>, transform_indices = @transform_6, window_bounds = array<i64: 1, 1>}, {transform_indices = @transform_7, window_bounds = array<i64: 8, 1>}]} {
    %c0 = arith.constant 0 : index
    %c0_0 = arith.constant 0 : index
    %0 = vector.load %arg1[%c0, %c0_0] : memref<8x64xf32, #tpu.memory_space<vmem>>, vector<8x64xf32>
    %1 = arith.truncf %0 : vector<8x64xf32> to vector<8x64xbf16>
    %c0_1 = arith.constant 0 : index
    %c0_2 = arith.constant 0 : index
    %2 = vector.load %arg2[%c0_1, %c0_2] : memref<64x64xbf16, #tpu.memory_space<vmem>>, vector<64x64xbf16>
    %cst = arith.constant dense<0.000000e+00> : vector<8x64xf32>
    %3 = tpu.matmul %1, %2, %cst {dimension_numbers = #tpu.dot_dimension_numbers<[1], [0], [0], [1], [0, 0, 1, 1], [], []>} : vector<8x64xbf16>, vector<64x64xbf16>, vector<8x64xf32> -> vector<8x64xf32>
    %c0_3 = arith.constant 0 : index
    %c0_4 = arith.constant 0 : index
    %4 = vector.load %arg3[%c0_3, %c0_4] : memref<1x64xf32, #tpu.memory_space<vmem>>, vector<1x64xf32>
    %5 = vector.broadcast %4 : vector<1x64xf32> to vector<8x64xf32>
    %6 = arith.addf %3, %5 : vector<8x64xf32>
    %cst_5 = arith.constant 0.000000e+00 : f32
    %7 = vector.broadcast %cst_5 : f32 to vector<8x64xf32>
    %8 = arith.maximumf %6, %7 : vector<8x64xf32>
    %9 = arith.truncf %8 : vector<8x64xf32> to vector<8x64xbf16>
    %c0_6 = arith.constant 0 : index
    %c0_7 = arith.constant 0 : index
    %10 = vector.load %arg4[%c0_6, %c0_7] : memref<64x32xbf16, #tpu.memory_space<vmem>>, vector<64x32xbf16>
    %cst_8 = arith.constant dense<0.000000e+00> : vector<8x32xf32>
    %11 = tpu.matmul %9, %10, %cst_8 {dimension_numbers = #tpu.dot_dimension_numbers<[1], [0], [0], [1], [0, 0, 1, 1], [], []>} : vector<8x64xbf16>, vector<64x32xbf16>, vector<8x32xf32> -> vector<8x32xf32>
    %c0_9 = arith.constant 0 : index
    %c0_10 = arith.constant 0 : index
    %12 = vector.load %arg5[%c0_9, %c0_10] : memref<1x32xf32, #tpu.memory_space<vmem>>, vector<1x32xf32>
    %13 = vector.broadcast %12 : vector<1x32xf32> to vector<8x32xf32>
    %14 = arith.addf %11, %13 : vector<8x32xf32>
    %cst_11 = arith.constant 0.000000e+00 : f32
    %15 = vector.broadcast %cst_11 : f32 to vector<8x32xf32>
    %16 = arith.maximumf %14, %15 : vector<8x32xf32>
    %c0_12 = arith.constant 0 : index
    %c0_13 = arith.constant 0 : index
    %17 = vector.load %arg6[%c0_12, %c0_13] : memref<1x32xf32, #tpu.memory_space<vmem>>, vector<1x32xf32>
    %18 = vector.broadcast %17 : vector<1x32xf32> to vector<8x32xf32>
    %19 = arith.mulf %16, %18 : vector<8x32xf32>
    %cst_14 = arith.constant dense<0.000000e+00> : vector<8xf32>
    %20 = vector.multi_reduction <add>, %19, %cst_14 [1] : vector<8x32xf32> to vector<8xf32>
    %21 = vector.shape_cast %20 : vector<8xf32> to vector<8x1xf32>
    %c0_15 = arith.constant 0 : index
    %c0_16 = arith.constant 0 : index
    %22 = vector.load %arg7[%c0_15, %c0_16] : memref<1x1xf32, #tpu.memory_space<vmem>>, vector<1x1xf32>
    %23 = vector.broadcast %22 : vector<1x1xf32> to vector<8x1xf32>
    %24 = arith.addf %21, %23 : vector<8x1xf32>
    %cst_17 = arith.constant 5.000000e-01 : f32
    %25 = vector.broadcast %cst_17 : f32 to vector<8x1xf32>
    %26 = arith.mulf %25, %24 : vector<8x1xf32>
    %27 = math.tanh %26 : vector<8x1xf32>
    %cst_18 = arith.constant 5.000000e-01 : f32
    %28 = vector.broadcast %cst_18 : f32 to vector<8x1xf32>
    %29 = arith.mulf %28, %27 : vector<8x1xf32>
    %cst_19 = arith.constant 5.000000e-01 : f32
    %30 = vector.broadcast %cst_19 : f32 to vector<8x1xf32>
    %31 = arith.addf %30, %29 : vector<8x1xf32>
    %c0_20 = arith.constant 0 : index
    %c0_21 = arith.constant 0 : index
    %32 = vector.load %arg8[%c0_20, %c0_21] : memref<8x1xf32, #tpu.memory_space<vmem>>, vector<8x1xf32>
    tpu.vector_store %arg8[%c0_20, %c0_21], %31 {strides = array<i32>} : memref<8x1xf32, #tpu.memory_space<vmem>>, vector<8x1xf32>,
    return
  }
  func.func @transform_0(%arg0: i32) -> (i32, i32) {
    %c0_i32 = arith.constant 0 : i32
    %c0_i32_0 = arith.constant 0 : i32
    return %arg0, %c0_i32 : i32, i32
  }
  func.func @transform_1(%arg0: i32) -> (i32, i32) {
    %c0_i32 = arith.constant 0 : i32
    %c0_i32_0 = arith.constant 0 : i32
    %c0_i32_1 = arith.constant 0 : i32
    return %c0_i32, %c0_i32_0 : i32, i32
  }
  func.func @transform_2(%arg0: i32) -> (i32, i32) {
    %c0_i32 = arith.constant 0 : i32
    %c0_i32_0 = arith.constant 0 : i32
    %c0_i32_1 = arith.constant 0 : i32
    return %c0_i32, %c0_i32_0 : i32, i32
  }
  func.func @transform_3(%arg0: i32) -> (i32, i32) {
    %c0_i32 = arith.constant 0 : i32
    %c0_i32_0 = arith.constant 0 : i32
    %c0_i32_1 = arith.constant 0 : i32
    return %c0_i32, %c0_i32_0 : i32, i32
  }
  func.func @transform_4(%arg0: i32) -> (i32, i32) {
    %c0_i32 = arith.constant 0 : i32
    %c0_i32_0 = arith.constant 0 : i32
    %c0_i32_1 = arith.constant 0 : i32
    return %c0_i32, %c0_i32_0 : i32, i32
  }
  func.func @transform_5(%arg0: i32) -> (i32, i32) {
    %c0_i32 = arith.constant 0 : i32
    %c0_i32_0 = arith.constant 0 : i32
    %c0_i32_1 = arith.constant 0 : i32
    return %c0_i32, %c0_i32_0 : i32, i32
  }
  func.func @transform_6(%arg0: i32) -> (i32, i32) {
    %c0_i32 = arith.constant 0 : i32
    %c0_i32_0 = arith.constant 0 : i32
    %c0_i32_1 = arith.constant 0 : i32
    return %c0_i32, %c0_i32_0 : i32, i32
  }
  func.func @transform_7(%arg0: i32) -> (i32, i32) {
    %c0_i32 = arith.constant 0 : i32
    %c0_i32_0 = arith.constant 0 : i32
    return %arg0, %c0_i32 : i32, i32
  }
}

</mosaic_0001>

<llo_original>
// kernel: tpu_custom_call.1
$region0: #{tpu_custom_call.1}
  #allocation0 [shape = 'u32[]', space=smem, size = 0x4, offset = 0x4, fixed_abs, tag = 'smem constant byte address 0x4 - core index']
  #allocation1 [shape = 'u32[144,128]{1,0:T(1,128)}', space=vmem, size = 0x12000, scoped, tag = 'internal scratch']
  #allocation2 [shape = 'f32[1,1]{1,0:T(1,128)S(1)}', space=vmem, size = 0x200, scoped, tag = 'scoped memory for tpu_custom_call.1']
  %s0 = inlined_call_operand.vmem [shape: f32[16,64], index: 0, kind: input, shape index: {}]
  %s1 = inlined_call_operand.vmem [shape: bf16[64,64], index: 1, kind: input, shape index: {}]
  %s2 = inlined_call_operand.vmem [shape: f32[1,64], index: 2, kind: input, shape index: {}]
  %s3 = inlined_call_operand.vmem [shape: bf16[64,32], index: 3, kind: input, shape index: {}]
  %s4 = inlined_call_operand.vmem [shape: f32[1,32], index: 4, kind: input, shape index: {}]
  %s5 = inlined_call_operand.vmem [shape: f32[1,32], index: 5, kind: input, shape index: {}]
  %s6 = inlined_call_operand.<no memory space> [shape: f32[1,1], index: 6, kind: input, shape index: {}]
  %s7 = inlined_call_operand.vmem [shape: f32[16,1], index: 7, kind: output, shape index: {}]
  %s8 = sld [smem:[#allocation0]]
  $region61: #{tpu_custom_call.1} parent=0
    _
  %s10 = ssub.s32 1, %s8
  %s11 = scalar_select 0, %s10, %s8
  %v12 = vstv %s6
  %13 = vst [vmem:[#allocation2] sm:$0x1] %v12
  loop: start=0, step=1, limit=4
  $region2: #{tpu_custom_call.1} parent=0 // loop_pre_header
    _
  $region3: #{tpu_custom_call.1} parent=0 // loop_header
    %s15 = sphi 0, %s19
    %p16 = scmp.ge.s32.totalorder %s15, 4
    %s25 = sphi 0, %s27
    %s28 = sphi 0, %s25
    %s29 = sphi 0, %s28
    %s45 = sphi 0, %s29
    %s49 = sphi 0, %s49
    %s51 = sphi 0, %s49
    %s52 = sphi 0, %s51
    %s66 = sphi 0, %s52
    %s70 = sphi 0, %s70
    %s72 = sphi 0, %s70
    %s73 = sphi 0, %s72
    %s87 = sphi 0, %s73
    %s91 = sphi 0, %s91
    %s93 = sphi 0, %s91
    %s94 = sphi 0, %s93
    %s108 = sphi 0, %s94
    %s112 = sphi 0, %s112
    %s114 = sphi 0, %s112
    %s115 = sphi 0, %s114
    %s129 = sphi 0, %s115
    %s133 = sphi 0, %s133
    %s135 = sphi 0, %s133
    %s136 = sphi 0, %s135
    %s150 = sphi 0, %s136
    %s154 = sphi 0, %s154
    %s156 = sphi 0, %s154
    %s157 = sphi 0, %s156
    %s171 = sphi 0, %s157
    %s177 = sphi 0, %s179
    %s180 = sphi 0, %s177
    %s181 = sphi 0, %s180
    %s197 = sphi 0, %s181
  $region4: #{tpu_custom_call.1} parent=0 // loop_header_branch
    %18 = sbr.rel (%p16) target = $region8
  $region5: #{tpu_custom_call.1} parent=0 // loop_body
    %s20 = ssub.s32 %s15, 1
    %s21 = ssub.s32 %s15, 2
    %s22 = sadd.s32 %s15, 1
    %s23 = ssub.s32 %s15, %s22
    %p24 = scmp.eq.s32.totalorder %s23, 0
    %s26 = sadd.s32 %s25, 1
    %s27 = scalar_select %p24, %s25, %s26
    %p30 = pneg %p24
    %p31 = scmp.eq.s32.totalorder %s15, 1
    %p32 = por %p30, %p31
    %p33 = scmp.ne.s32.totalorder %s25, %s28
    %p34 = scmp.eq.s32.totalorder %s15, 0
    %p35 = por %p33, %p34
    %p36 = scmp.ne.s32.totalorder %s25, %s28
    %p37 = scmp.eq.s32.totalorder %s20, 1
    %p38 = por %p36, %p37
    %p39 = scmp.ne.s32.totalorder %s28, %s29
    %p40 = scmp.eq.s32.totalorder %s20, 0
    %p41 = por %p39, %p40
    %p42 = scmp.ne.s32.totalorder %s28, %s29
    %p43 = scmp.eq.s32.totalorder %s21, 1
    %p44 = por %p42, %p43
    %p46 = scmp.ne.s32.totalorder %s29, %s45
    %p47 = scmp.eq.s32.totalorder %s21, 0
    %p48 = por %p46, %p47
    %s50 = sadd.s32 %s49, 1
    %p53 = scmp.eq.s32.totalorder %s15, 1
    %p54 = scmp.ne.s32.totalorder %s49, %s51
    %p55 = scmp.eq.s32.totalorder %s15, 0
    %p56 = por %p54, %p55
    %p57 = scmp.ne.s32.totalorder %s49, %s51
    %p58 = scmp.eq.s32.totalorder %s20, 1
    %p59 = por %p57, %p58
    %p60 = scmp.ne.s32.totalorder %s51, %s52
    %p61 = scmp.eq.s32.totalorder %s20, 0
    %p62 = por %p60, %p61
    %p63 = scmp.ne.s32.totalorder %s51, %s52
    %p64 = scmp.eq.s32.totalorder %s21, 1
    %p65 = por %p63, %p64
    %p67 = scmp.ne.s32.totalorder %s52, %s66
    %p68 = scmp.eq.s32.totalorder %s21, 0
    %p69 = por %p67, %p68
    %s71 = sadd.s32 %s70, 1
    %p74 = scmp.eq.s32.totalorder %s15, 1
    %p75 = scmp.ne.s32.totalorder %s70, %s72
    %p76 = scmp.eq.s32.totalorder %s15, 0
    %p77 = por %p75, %p76
    %p78 = scmp.ne.s32.totalorder %s70, %s72
    %p79 = scmp.eq.s32.totalorder %s20, 1
    %p80 = por %p78, %p79
    %p81 = scmp.ne.s32.totalorder %s72, %s73
    %p82 = scmp.eq.s32.totalorder %s20, 0
    %p83 = por %p81, %p82
    %p84 = scmp.ne.s32.totalorder %s72, %s73
    %p85 = scmp.eq.s32.totalorder %s21, 1
    %p86 = por %p84, %p85
    %p88 = scmp.ne.s32.totalorder %s73, %s87
    %p89 = scmp.eq.s32.totalorder %s21, 0
    %p90 = por %p88, %p89
    %s92 = sadd.s32 %s91, 1
    %p95 = scmp.eq.s32.totalorder %s15, 1
    %p96 = scmp.ne.s32.totalorder %s91, %s93
    %p97 = scmp.eq.s32.totalorder %s15, 0
    %p98 = por %p96, %p97
    %p99 = scmp.ne.s32.totalorder %s91, %s93
    %p100 = scmp.eq.s32.totalorder %s20, 1
    %p101 = por %p99, %p100
    %p102 = scmp.ne.s32.totalorder %s93, %s94
    %p103 = scmp.eq.s32.totalorder %s20, 0
    %p104 = por %p102, %p103
    %p105 = scmp.ne.s32.totalorder %s93, %s94
    %p106 = scmp.eq.s32.totalorder %s21, 1
    %p107 = por %p105, %p106
    %p109 = scmp.ne.s32.totalorder %s94, %s108
    %p110 = scmp.eq.s32.totalorder %s21, 0
    %p111 = por %p109, %p110
    %s113 = sadd.s32 %s112, 1
    %p116 = scmp.eq.s32.totalorder %s15, 1
    %p117 = scmp.ne.s32.totalorder %s112, %s114
    %p118 = scmp.eq.s32.totalorder %s15, 0
    %p119 = por %p117, %p118
    %p120 = scmp.ne.s32.totalorder %s112, %s114
    %p121 = scmp.eq.s32.totalorder %s20, 1
    %p122 = por %p120, %p121
    %p123 = scmp.ne.s32.totalorder %s114, %s115
    %p124 = scmp.eq.s32.totalorder %s20, 0
    %p125 = por %p123, %p124
    %p126 = scmp.ne.s32.totalorder %s114, %s115
    %p127 = scmp.eq.s32.totalorder %s21, 1
    %p128 = por %p126, %p127
    %p130 = scmp.ne.s32.totalorder %s115, %s129
    %p131 = scmp.eq.s32.totalorder %s21, 0
    %p132 = por %p130, %p131
    %s134 = sadd.s32 %s133, 1
    %p137 = scmp.eq.s32.totalorder %s15, 1
    %p138 = scmp.ne.s32.totalorder %s133, %s135
    %p139 = scmp.eq.s32.totalorder %s15, 0
    %p140 = por %p138, %p139
    %p141 = scmp.ne.s32.totalorder %s133, %s135
    %p142 = scmp.eq.s32.totalorder %s20, 1
    %p143 = por %p141, %p142
    %p144 = scmp.ne.s32.totalorder %s135, %s136
    %p145 = scmp.eq.s32.totalorder %s20, 0
    %p146 = por %p144, %p145
    %p147 = scmp.ne.s32.totalorder %s135, %s136
    %p148 = scmp.eq.s32.totalorder %s21, 1
    %p149 = por %p147, %p148
    %p151 = scmp.ne.s32.totalorder %s136, %s150
    %p152 = scmp.eq.s32.totalorder %s21, 0
    %p153 = por %p151, %p152
    %s155 = sadd.s32 %s154, 1
    %p158 = scmp.eq.s32.totalorder %s15, 1
    %p159 = scmp.ne.s32.totalorder %s154, %s156
    %p160 = scmp.eq.s32.totalorder %s15, 0
    %p161 = por %p159, %p160
    %p162 = scmp.ne.s32.totalorder %s154, %s156
    %p163 = scmp.eq.s32.totalorder %s20, 1
    %p164 = por %p162, %p163
    %p165 = scmp.ne.s32.totalorder %s156, %s157
    %p166 = scmp.eq.s32.totalorder %s20, 0
    %p167 = por %p165, %p166
    %p168 = scmp.ne.s32.totalorder %s156, %s157
    %p169 = scmp.eq.s32.totalorder %s21, 1
    %p170 = por %p168, %p169
    %p172 = scmp.ne.s32.totalorder %s157, %s171
    %p173 = scmp.eq.s32.totalorder %s21, 0
    %p174 = por %p172, %p173
    %s175 = ssub.s32 %s15, %s22
    %p176 = scmp.eq.s32.totalorder %s175, 0
    %s178 = sadd.s32 %s177, 1
    %s179 = scalar_select %p176, %s177, %s178
    %p182 = pneg %p176
    %p183 = scmp.eq.s32.totalorder %s15, 1
    %p184 = por %p182, %p183
    %p185 = scmp.ne.s32.totalorder %s177, %s180
    %p186 = scmp.eq.s32.totalorder %s15, 0
    %p187 = por %p185, %p186
    %p188 = scmp.ne.s32.totalorder %s177, %s180
    %p189 = scmp.eq.s32.totalorder %s20, 1
    %p190 = por %p188, %p189
    %p191 = scmp.ne.s32.totalorder %s180, %s181
    %p192 = scmp.eq.s32.totalorder %s20, 0
    %p193 = por %p191, %p192
    %p194 = scmp.ne.s32.totalorder %s180, %s181
    %p195 = scmp.eq.s32.totalorder %s21, 1
    %p196 = por %p194, %p195
    %p198 = scmp.ne.s32.totalorder %s181, %s197
    %p199 = scmp.eq.s32.totalorder %s21, 0
    %p200 = por %p198, %p199
    %p201 = scmp.le.s32.totalorder 1, %s15
    %p202 = scmp.lt.s32.totalorder %s15, 3
    %p203 = pnand %p201, %p202
    %p204 = pneg %p203
    // Predicated region
    $region9: #{tpu_custom_call.1} parent=5 // pred_check
      _
    $region10: #{tpu_custom_call.1} parent=5 // pred_check_branch
      %206 = sbr.rel (%p203) target = $region12
    $region11: #{tpu_custom_call.1} parent=5 // pred_region
      %s207 = ssub.s32 %s15, 1
      // Predicated region
      $region13: #{tpu_custom_call.1} parent=11 // pred_check
        %p208 = pneg %p62
      $region14: #{tpu_custom_call.1} parent=11 // pred_check_branch
        %210 = sbr.rel (%p208) target = $region16
      $region15: #{tpu_custom_call.1} parent=11 // pred_region
        _
      $region16: #{tpu_custom_call.1} parent=11 // pred_fallthru
        _
      // Predicated region
      $region17: #{tpu_custom_call.1} parent=11 // pred_check
        %p211 = pneg %p83
      $region18: #{tpu_custom_call.1} parent=11 // pred_check_branch
        %213 = sbr.rel (%p211) target = $region20
      $region19: #{tpu_custom_call.1} parent=11 // pred_region
        _
      $region20: #{tpu_custom_call.1} parent=11 // pred_fallthru
        _
      // Predicated region
      $region21: #{tpu_custom_call.1} parent=11 // pred_check
        %p214 = pneg %p104
      $region22: #{tpu_custom_call.1} parent=11 // pred_check_branch
        %216 = sbr.rel (%p214) target = $region24
      $region23: #{tpu_custom_call.1} parent=11 // pred_region
        _
      $region24: #{tpu_custom_call.1} parent=11 // pred_fallthru
        _
      // Predicated region
      $region25: #{tpu_custom_call.1} parent=11 // pred_check
        %p217 = pneg %p125
      $region26: #{tpu_custom_call.1} parent=11 // pred_check_branch
        %219 = sbr.rel (%p217) target = $region28
      $region27: #{tpu_custom_call.1} parent=11 // pred_region
        _
      $region28: #{tpu_custom_call.1} parent=11 // pred_fallthru
        _
      // Predicated region
      $region29: #{tpu_custom_call.1} parent=11 // pred_check
        %p220 = pneg %p146
      $region30: #{tpu_custom_call.1} parent=11 // pred_check_branch
        %222 = sbr.rel (%p220) target = $region32
      $region31: #{tpu_custom_call.1} parent=11 // pred_region
        _
      $region32: #{tpu_custom_call.1} parent=11 // pred_fallthru
        _
      // Predicated region
      $region33: #{tpu_custom_call.1} parent=11 // pred_check
        %p223 = pneg %p167
      $region34: #{tpu_custom_call.1} parent=11 // pred_check_branch
        %225 = sbr.rel (%p223) target = $region36
      $region35: #{tpu_custom_call.1} parent=11 // pred_region
        _
      $region36: #{tpu_custom_call.1} parent=11 // pred_fallthru
        _
    $region12: #{tpu_custom_call.1} parent=5 // pred_fallthru
      _
    %p226 = scmp.lt.s32.totalorder %s15, 2
    // Predicated region
    $region37: #{tpu_custom_call.1} parent=5 // pred_check
      %p227 = pneg %p226
    $region38: #{tpu_custom_call.1} parent=5 // pred_check_branch
      %229 = sbr.rel (%p227) target = $region40
    $region39: #{tpu_custom_call.1} parent=5 // pred_region
      // Predicated region
      $region41: #{tpu_custom_call.1} parent=39 // pred_check
        %p230 = pneg %p35
      $region42: #{tpu_custom_call.1} parent=39 // pred_check_branch
        %232 = sbr.rel (%p230) target = $region44
      $region43: #{tpu_custom_call.1} parent=39 // pred_region
        %p233 = scmp.lt.s32.totalorder %s15, 1
        %s234 = scalar_select %p233, %s15, 1
        %s235 = smul.addr %s234, 8
        %s236 = scalar_lea.vmem %s0, %s235
      $region44: #{tpu_custom_call.1} parent=39 // pred_fallthru
        _
    $region40: #{tpu_custom_call.1} parent=5 // pred_fallthru
      _
    %p237 = scmp.le.s32.totalorder 1, %s15
    %p238 = scmp.lt.s32.totalorder %s15, 3
    %p239 = pnand %p237, %p238
    %p240 = pneg %p239
    // Predicated region
    $region45: #{tpu_custom_call.1} parent=5 // pred_check
      _
    $region46: #{tpu_custom_call.1} parent=5 // pred_check_branch
      %242 = sbr.rel (%p239) target = $region48
    $region47: #{tpu_custom_call.1} parent=5 // pred_region
      %s243 = ssub.s32 %s15, 1
      %p244 = scmp.lt.s32.totalorder %s20, 1
      %s245 = scalar_select %p244, %s20, 1
      %s246 = smul.addr %s245, 8
      %s247 = scalar_lea.vmem %s0, %s246
      %p248 = pneg %p41
      %p249 = pneg %p38
      %p250 = pneg %p62
      %p251 = pneg %p59
      %p252 = pneg %p83
      %p253 = pneg %p80
      %p254 = pneg %p104
      %p255 = pneg %p101
      %p256 = pneg %p125
      %p257 = pneg %p122
      %p258 = pneg %p146
      %p259 = pneg %p143
      %p260 = pneg %p167
      %p261 = pneg %p164
      %p262 = pneg %p193
      %p263 = pneg %p190
      %p264 = scmp.lt.s32.totalorder %s20, 1
      %s265 = scalar_select %p264, %s20, 1
      %s266 = smul.addr %s265, 8
      %s267 = scalar_lea.vmem %s7, %s266
      %p268 = scmp.lt.s32.totalorder %s20, 1
      %s269 = scalar_select %p268, %s20, 1
      %s270 = smul.addr %s269, 8
      %s271 = scalar_lea.vmem %s0, %s270
      %p272 = scmp.lt.s32.totalorder %s20, 1
      %s273 = scalar_select %p272, %s20, 1
      %s274 = smul.addr %s273, 8
      %s275 = scalar_lea.vmem %s7, %s274
      %v277 = vld [vmem:[%s271] sm:$0xff]
      %v278 = vpack.c.bf16 %v277, %v277
      %v279 = vld [vmem:[%s1] sm:$0xf]
      %v280 = vld [vmem:[%s1 + $0x4] sm:$0xf]
      %v281 = vld [vmem:[%s1 + $0x8] sm:$0xf]
      %v282 = vld [vmem:[%s1 + $0xc] sm:$0xf]
      %v283 = vld [vmem:[%s1 + $0x10] sm:$0xf]
      %v284 = vld [vmem:[%s1 + $0x14] sm:$0xf]
      %v285 = vld [vmem:[%s1 + $0x18] sm:$0xf]
      %v286 = vld [vmem:[%s1 + $0x1c] sm:$0xf]
      %v287 = vld [vmem:[%s2] sm:$0x1]
      %v289 = vlaneseq
      %v290 = vshrl.u32 %v289, 7
      %v291 = vsub.s32 0, %v290
      %v292 = vrot.slane %v287, %v291
      %v302 = vunpack.c.l.b16 %v279
      %v303 = vunpack.c.l.b16 %v280
      %v304 = vunpack.c.l.b16 %v281
      %v305 = vunpack.c.l.b16 %v282
      %v306 = vunpack.c.l.b16 %v283
      %v307 = vunpack.c.l.b16 %v284
      %v308 = vunpack.c.l.b16 %v285
      %v309 = vunpack.c.l.b16 %v286
      %v310 = vpack.c.b16 %v303, %v302
      %v311 = vpack.c.b16 %v305, %v304
      %v312 = vpack.c.b16 %v307, %v306
      %v313 = vpack.c.b16 %v309, %v308
      %vm318 = vcmask 523264
      %v320 = vsel %vm318, %v278, 0
      %322 = vmatprep.subr.bf16.mxu0 0
      %323 = vmatpush1.bf16.msra.mxu0 %v310
      %324 = vmatprep.subr.bf16.mxu0 0
      %325 = vmatpush1.bf16.msra.mxu0 %v311
      %326 = vmatprep.subr.bf16.mxu0 0
      %327 = vmatpush1.bf16.msra.mxu0 %v312
      %328 = vmatprep.subr.bf16.mxu0 0
      %329 = vmatpush1.bf16.msra.mxu0 %v313
      %330 = vmatprep.subr.bf16.mxu0 0
      %331 = vmatpush1.bf16.msra.mxu0 0
      %332 = vmatprep.subr.bf16.mxu0 0
      %333 = vmatpush1.bf16.msra.mxu0 0
      %334 = vmatprep.subr.bf16.mxu0 0
      %335 = vmatpush1.bf16.msra.mxu0 0
      %336 = vmatprep.subr.bf16.mxu0 0
      %337 = vmatpush1.bf16.msra.mxu0 0
      %338 = vmatprep.subr.bf16.mxu0 0
      %339 = vmatpush1.bf16.msra.mxu0 0
      %340 = vmatprep.subr.bf16.mxu0 0
      %341 = vmatpush1.bf16.msra.mxu0 0
      %342 = vmatprep.subr.bf16.mxu0 0
      %343 = vmatpush1.bf16.msra.mxu0 0
      %344 = vmatprep.subr.bf16.mxu0 0
      %345 = vmatpush1.bf16.msra.mxu0 0
      %346 = vmatprep.subr.bf16.mxu0 0
      %347 = vmatpush1.bf16.msra.mxu0 0
      %348 = vmatprep.subr.bf16.mxu0 0
      %349 = vmatpush1.bf16.msra.mxu0 0
      %350 = vmatprep.subr.bf16.mxu0 0
      %351 = vmatpush1.bf16.msra.mxu0 0
      %352 = vmatprep.subr.bf16.mxu0 0
      %353 = vmatpush1.bf16.msra.mxu0 0
      %354 = vmatprep.mubr.bf16.mxu0 0
      %355 = vmatmul.mubr.bf16.gmra.mrb[0].mxu0 %v320
      %v356 = vpop.f32.mrb[0].mxu0
      %v357 = vadd.f32 %v292, %v356
      %v358 = vpop.f32.mrb[0].mxu0
      %v359 = vpop.f32.mrb[0].mxu0
      %v360 = vpop.f32.mrb[0].mxu0
      %361 = vdwg.mxu0
      %v362 = vmax.f32 %v357, 0.0
      %v363 = vpack.c.bf16 %v362, %v362
      %v364 = vld [vmem:[%s3] sm:$0xf]
      %v365 = vld [vmem:[%s3 + $0x4] sm:$0xf]
      %v366 = vld [vmem:[%s3 + $0x8] sm:$0xf]
      %v367 = vld [vmem:[%s3 + $0xc] sm:$0xf]
      %v368 = vld [vmem:[%s3 + $0x10] sm:$0xf]
      %v369 = vld [vmem:[%s3 + $0x14] sm:$0xf]
      %v370 = vld [vmem:[%s3 + $0x18] sm:$0xf]
      %v371 = vld [vmem:[%s3 + $0x1c] sm:$0xf]
      %v372 = vld [vmem:[%s4] sm:$0x1]
      %v374 = vlaneseq
      %v375 = vshrl.u32 %v374, 7
      %v376 = vsub.s32 0, %v375
      %v377 = vrot.slane %v372, %v376
      %v387 = vunpack.c.l.b16 %v364
      %v388 = vunpack.c.l.b16 %v365
      %v389 = vunpack.c.l.b16 %v366
      %v390 = vunpack.c.l.b16 %v367
      %v391 = vunpack.c.l.b16 %v368
      %v392 = vunpack.c.l.b16 %v369
      %v393 = vunpack.c.l.b16 %v370
      %v394 = vunpack.c.l.b16 %v371
      %v395 = vpack.c.b16 %v388, %v387
      %v396 = vpack.c.b16 %v390, %v389
      %v397 = vpack.c.b16 %v392, %v391
      %v398 = vpack.c.b16 %v394, %v393
      %v404 = vsel %vm318, %v363, 0
      %406 = vmatprep.subr.bf16.mxu0 0
      %407 = vmatpush1.bf16.msra.mxu0 %v395
      %408 = vmatprep.subr.bf16.mxu0 0
      %409 = vmatpush1.bf16.msra.mxu0 %v396
      %410 = vmatprep.subr.bf16.mxu0 0
      %411 = vmatpush1.bf16.msra.mxu0 %v397
      %412 = vmatprep.subr.bf16.mxu0 0
      %413 = vmatpush1.bf16.msra.mxu0 %v398
      %414 = vmatprep.subr.bf16.mxu0 0
      %415 = vmatpush1.bf16.msra.mxu0 0
      %416 = vmatprep.subr.bf16.mxu0 0
      %417 = vmatpush1.bf16.msra.mxu0 0
      %418 = vmatprep.subr.bf16.mxu0 0
      %419 = vmatpush1.bf16.msra.mxu0 0
      %420 = vmatprep.subr.bf16.mxu0 0
      %421 = vmatpush1.bf16.msra.mxu0 0
      %422 = vmatprep.subr.bf16.mxu0 0
      %423 = vmatpush1.bf16.msra.mxu0 0
      %424 = vmatprep.subr.bf16.mxu0 0
      %425 = vmatpush1.bf16.msra.mxu0 0
      %426 = vmatprep.subr.bf16.mxu0 0
      %427 = vmatpush1.bf16.msra.mxu0 0
      %428 = vmatprep.subr.bf16.mxu0 0
      %429 = vmatpush1.bf16.msra.mxu0 0
      %430 = vmatprep.subr.bf16.mxu0 0
      %431 = vmatpush1.bf16.msra.mxu0 0
      %432 = vmatprep.subr.bf16.mxu0 0
      %433 = vmatpush1.bf16.msra.mxu0 0
      %434 = vmatprep.subr.bf16.mxu0 0
      %435 = vmatpush1.bf16.msra.mxu0 0
      %436 = vmatprep.subr.bf16.mxu0 0
      %437 = vmatpush1.bf16.msra.mxu0 0
      %438 = vmatprep.mubr.bf16.mxu0 0
      %439 = vmatmul.mubr.bf16.gmra.mrb[0].mxu0 %v404
      %v440 = vpop.f32.mrb[0].mxu0
      %v441 = vadd.f32 %v377, %v440
      %v442 = vpop.f32.mrb[0].mxu0
      %v443 = vpop.f32.mrb[0].mxu0
      %v444 = vpop.f32.mrb[0].mxu0
      %445 = vdwg.mxu0
      %v446 = vmax.f32 %v441, 0.0
      %v447 = vld [vmem:[%s5] sm:$0x1]
      %v449 = vlaneseq
      %v450 = vshrl.u32 %v449, 7
      %v451 = vsub.s32 0, %v450
      %v452 = vrot.slane %v447, %v451
      %v454 = vmul.f32 %v446, %v452
      %vm455 = vcmask 261120
      %v456 = vsel %vm455, %v454, 0.0
      %457 = vadd.xlane.f32.xlu0 %v456
      %v458 = vpop.xlane.xlu0 %457
      %v459 = vld [vmem:[#allocation2] sm:$0x1]
      %v461 = vlaneseq
      %v462 = vshrl.u32 %v461, 7
      %v463 = vsub.s32 0, %v462
      %v464 = vrot.slane %v459, %v463
      %v466 = vadd.f32 %v458, %v464
      %v467 = vmul.f32 %v466, 0.5
      %v468 = vtanh.pop %v467
      %v469 = vmul.f32 %v468, 0.5
      %v470 = vadd.f32 %v469, 0.5
      %vm471 = vcmask 7168
      %472 = vst.msk [vmem:[%s275] sm:$0xff] %vm471, %v470
      %p473 = scmp.lt.s32.totalorder %s20, 1
      %s474 = scalar_select %p473, %s20, 1
      %s475 = smul.addr %s474, 8
      %s476 = scalar_lea.vmem %s7, %s475
      // Predicated region
      $region49: #{tpu_custom_call.1} parent=47 // pred_check
        %p477 = pneg %p190
      $region50: #{tpu_custom_call.1} parent=47 // pred_check_branch
        %479 = sbr.rel (%p477) target = $region52
      $region51: #{tpu_custom_call.1} parent=47 // pred_region
        _
      $region52: #{tpu_custom_call.1} parent=47 // pred_fallthru
        _
    $region48: #{tpu_custom_call.1} parent=5 // pred_fallthru
      _
    %p480 = scmp.le.s32.totalorder 2, %s15
    // Predicated region
    $region53: #{tpu_custom_call.1} parent=5 // pred_check
      %p481 = pneg %p480
    $region54: #{tpu_custom_call.1} parent=5 // pred_check_branch
      %483 = sbr.rel (%p481) target = $region56
    $region55: #{tpu_custom_call.1} parent=5 // pred_region
      %s484 = ssub.s32 %s15, 2
      // Predicated region
      $region57: #{tpu_custom_call.1} parent=55 // pred_check
        %p485 = pneg %p196
      $region58: #{tpu_custom_call.1} parent=55 // pred_check_branch
        %487 = sbr.rel (%p485) target = $region60
      $region59: #{tpu_custom_call.1} parent=55 // pred_region
        %p488 = scmp.lt.s32.totalorder %s21, 1
        %s489 = scalar_select %p488, %s21, 1
        %s490 = smul.addr %s489, 8
        %s491 = scalar_lea.vmem %s7, %s490
      $region60: #{tpu_custom_call.1} parent=55 // pred_fallthru
        _
    $region56: #{tpu_custom_call.1} parent=5 // pred_fallthru
      _
  $region6: #{tpu_custom_call.1} parent=0 // loop_footer
    %s19 = sadd.s32 1, %s15
  $region7: #{tpu_custom_call.1} parent=0 // loop_footer_branch
    %14 = sbr.rel target = $region3
  $region8: #{tpu_custom_call.1} parent=0 // loop_exit
    _

</llo_original>
